<compile_context>
chip_gen: v7x
topology: tpu7x:2x2x1
jax: 0.10.0
libtpu: 0.0.40
codegen_flags: <defaults>
</compile_context>

<pallas_src>
import functools

import jax
import jax.numpy as jnp
from jax import lax
from jax.experimental import pallas as pl
from jax.experimental.pallas import tpu as pltpu

K = 5          # kernel_size (class is "..._k5_...")
PAD = 2        # P1 = (1*(1-1) - 1 + 1*(K-1))//2 + 1 = 2
POOL = 4       # MaxPool2d(4)
C_OUT = 16     # Conv2d(1, 16, ...)


def _cnn_kernel(xp_ref, wmat_ref, th_ref, o_ref, *, H, W, Ho, Wo):
    """One batch element per grid step (batch axis is the parallel grid).

    xp_ref   : (H+2P, W+2P)      bf16 VMEM — sign-binarized, zero-padded input
    wmat_ref : (K*(W+2P), 16*W)  bf16 VMEM — banded im2col conv-weight matrix
    th_ref   : (1,)              f32  SMEM — thresh1
    o_ref    : (Ho, 16*Wo)       bf16 VMEM — channel-on-lane pooled/quantized out
    """
    CW = C_OUT * W          # 16 channels folded onto the lane axis
    Mo = C_OUT * Wo

    xp = xp_ref[...]                                            # (Hp, Wp) bf16

    # --- conv(1->16) as ONE MXU matmul: concat the K row-shifted windows along
    # lanes -> (H, K*Wp); banded weight matrix produces all channels on lanes.
    A = jnp.concatenate([xp[ki:ki + H, :] for ki in range(K)], axis=1)
    conv = jnp.dot(A, wmat_ref[...],
                   preferred_element_type=jnp.float32)          # (H, CW) f32 exact

    # --- ReLU, all channels at once (f32 elementwise; bf16 only on MXU operands).
    r = jnp.maximum(conv, 0.0)

    # --- MaxPool2d(4), W direction (lanes): sliding 4-max, then one matmul that
    # selects every 4th column (the pool origins) for all 16 channels at once.
    nW = CW - (POOL - 1)
    mw = r[:, 0:nW]
    for dj in range(1, POOL):
        mw = jnp.maximum(mw, r[:, dj:dj + nW])                  # (H, nW)
    ll = lax.broadcasted_iota(jnp.int32, (nW, Mo), 0)
    mm = lax.broadcasted_iota(jnp.int32, (nW, Mo), 1)
    Sw = jnp.where(ll == POOL * mm, 1.0, 0.0).astype(jnp.bfloat16)   # (nW, Mo)
    # mw holds integers in [0, 25] -> exact in bf16; selection matmul is exact.
    mwsel = jnp.dot(mw.astype(jnp.bfloat16), Sw,
                    preferred_element_type=jnp.float32)         # (H, Mo)

    # --- MaxPool2d(4), H direction (sublanes): sliding 4-max + pick rows 0,4,...
    nH = H - (POOL - 1)
    mh = mwsel[0:nH, :]
    for di in range(1, POOL):
        mh = jnp.maximum(mh, mwsel[di:di + nH, :])              # (nH, Mo)
    pooled = jnp.concatenate(
        [mh[POOL * p:POOL * p + 1, :] for p in range(Ho)], axis=0)   # (Ho, Mo)

    # --- subtract thresh1 + output quantization (sign); single lane-dense store.
    q = jnp.where(pooled - th_ref[0] >= 0.0, 1.0, -1.0)
    o_ref[...] = q.astype(o_ref.dtype)


def cnn_forward(x, weight, thresh1):
    """x: (B,1,H,W) f32; weight: (16,1,5,5) f32; thresh1: (1,) f32."""
    B, Cin, H, W = x.shape
    assert Cin == 1 and H % POOL == 0 and W % POOL == 0
    Ho, Wo = H // POOL, W // POOL
    Hp, Wp = H + 2 * PAD, W + 2 * PAD

    # Glue: output_quantize(x) (sign) + zero pad.  +-1/0 are exact in bf16, so the
    # kernel input is half-width with no precision loss and no separate pad mask.
    bx = jnp.where(x[:, 0] >= 0.0, 1.0, -1.0).astype(jnp.bfloat16)
    bxpad = jnp.pad(bx, ((0, 0), (PAD, PAD), (PAD, PAD)))       # (B, Hp, Wp)

    # Glue: weight_quantize (sign) + banded im2col layout so the conv is a single
    # matmul with channels on lanes:
    #   wmat[ki*Wp + wp, c*W + w] = wq[c, ki, wp - w]  if 0 <= wp - w < K else 0
    wq = jnp.where(weight >= 0.0, 1.0, -1.0).astype(jnp.float32)[:, 0]   # (16,K,K)
    kj = jnp.arange(Wp)[:, None] - jnp.arange(W)[None, :]       # (Wp, W)
    valid = ((kj >= 0) & (kj < K)).astype(jnp.float32)
    band = wq[:, :, jnp.clip(kj, 0, K - 1)] * valid[None, None]  # (16, K, Wp, W)
    wmat = jnp.transpose(band, (1, 2, 0, 3)).reshape(K * Wp, C_OUT * W)
    wmat = wmat.astype(jnp.bfloat16)                            # +-1/0 exact

    kernel = functools.partial(_cnn_kernel, H=H, W=W, Ho=Ho, Wo=Wo)
    out = pl.pallas_call(
        kernel,
        out_shape=jax.ShapeDtypeStruct((B, Ho, C_OUT * Wo), jnp.bfloat16),
        grid=(B,),
        in_specs=[
            pl.BlockSpec((None, Hp, Wp), lambda b: (b, 0, 0)),       # per-batch input
            pl.BlockSpec((K * Wp, C_OUT * W), lambda b: (0, 0)),     # weights, resident
            pl.BlockSpec(memory_space=pltpu.MemorySpace.SMEM),       # thresh1 scalar
        ],
        out_specs=pl.BlockSpec((None, Ho, C_OUT * Wo), lambda b: (b, 0, 0)),
        compiler_params=pltpu.CompilerParams(
            dimension_semantics=("parallel",)),   # 2 TCs on v7x; neutral v5e/v6e
    )(bxpad, wmat, thresh1.astype(jnp.float32))

    # SCAMP 4x4 channel tiling: pure layout plumbing on the channel-on-lane output
    # (lane m = c*Wo + j; channel c -> tile-row c%4, tile-col c//4).
    q = out.astype(jnp.float32).reshape(B, Ho, 4, 4, Wo)        # (b, i, c//4, c%4, j)
    tiled = jnp.transpose(q, (0, 3, 1, 2, 4)).reshape(B, 4 * Ho, 4 * Wo)
    return tiled[:, None]                                        # (B, 1, 4Ho, 4Wo)


def reference(x, weight, thresh1):
    """Pure-JAX reference of the same forward semantics."""
    bx = jnp.where(x >= 0.0, 1.0, -1.0).astype(jnp.float32)
    wq = jnp.where(weight >= 0.0, 1.0, -1.0).astype(jnp.float32)
    conv = lax.conv_general_dilated(
        bx, wq, window_strides=(1, 1), padding=((PAD, PAD), (PAD, PAD)),
        dimension_numbers=('NCHW', 'OIHW', 'NCHW'),
        precision=lax.Precision.HIGHEST)
    r = jnp.maximum(conv, 0.0)
    pooled = lax.reduce_window(r, -jnp.inf, lax.max,
                               (1, 1, POOL, POOL), (1, 1, POOL, POOL), 'VALID')
    q = jnp.where(pooled - thresh1.reshape(1, 1, 1, 1) >= 0.0, 1.0, -1.0)
    cols = []
    for j in range(4):
        col = jnp.concatenate([q[:, c:c + 1] for c in range(4 * j, 4 * j + 4)], axis=2)
        cols.append(col)
    return jnp.concatenate(cols, axis=3).astype(jnp.float32)


if __name__ == "__main__":
    key = jax.random.PRNGKey(0)
    kx, kw, kt = jax.random.split(key, 3)

    B, H, W = 2, 16, 16
    x = jax.random.normal(kx, (B, 1, H, W), dtype=jnp.float32)
    # Deterministic parameter init (only the sign of the conv weights matters
    # after quantization); thresh1 ~ torch.rand(1).
    weight = jax.random.uniform(kw, (C_OUT, 1, K, K), dtype=jnp.float32,
                                minval=-1.0, maxval=1.0)
    thresh1 = jax.random.uniform(kt, (1,), dtype=jnp.float32)

    out = jax.block_until_ready(cnn_forward(x, weight, thresh1))
    ref = jax.block_until_ready(reference(x, weight, thresh1))

    assert out.shape == ref.shape == (B, 1, 4 * (H // POOL), 4 * (W // POOL))
    assert bool(jnp.array_equal(out, ref)), "Pallas kernel mismatch vs JAX reference"
    print("KERNEL_OK")
</pallas_src>

<mosaic_0001>
module attributes {stable_mosaic.version = 11 : i64} {
  func.func @_cnn_kernel(%arg0: i32, %arg1: memref<1x20x20xbf16, #tpu.memory_space<vmem>>, %arg2: memref<100x256xbf16, #tpu.memory_space<vmem>>, %arg3: memref<1xf32, #tpu.memory_space<smem>>, %arg4: memref<1x4x64xbf16, #tpu.memory_space<vmem>>) attributes {dimension_semantics = [#tpu.dimension_semantics<parallel>], iteration_bounds = array<i64: 2>, scalar_prefetch = 0 : i64, scratch_operands = 0 : i64, tpu.core_type = #tpu.core_type<tc>, window_params = [{transform_indices = @transform_0, window_bounds = array<i64: 1, 20, 20>}, {pipeline_mode = #tpu.pipeline_mode<synchronous>, transform_indices = @transform_1, window_bounds = array<i64: 100, 256>}, {transform_indices = @transform_2, window_bounds = array<i64: 1>}, {transform_indices = @transform_3, window_bounds = array<i64: 1, 4, 64>}]} {
    %c0 = arith.constant 0 : index
    %c0_0 = arith.constant 0 : index
    %c0_1 = arith.constant 0 : index
    %0 = vector.load %arg1[%c0, %c0_0, %c0_1] : memref<1x20x20xbf16, #tpu.memory_space<vmem>>, vector<1x20x20xbf16>
    %1 = vector.shape_cast %0 : vector<1x20x20xbf16> to vector<20x20xbf16>
    %2 = vector.extract_strided_slice %1 {offsets = [0, 0], sizes = [16, 20], strides = [1, 1]} : vector<20x20xbf16> to vector<16x20xbf16>
    %3 = vector.extract_strided_slice %1 {offsets = [1, 0], sizes = [16, 20], strides = [1, 1]} : vector<20x20xbf16> to vector<16x20xbf16>
    %4 = vector.extract_strided_slice %1 {offsets = [2, 0], sizes = [16, 20], strides = [1, 1]} : vector<20x20xbf16> to vector<16x20xbf16>
    %5 = vector.extract_strided_slice %1 {offsets = [3, 0], sizes = [16, 20], strides = [1, 1]} : vector<20x20xbf16> to vector<16x20xbf16>
    %6 = vector.extract_strided_slice %1 {offsets = [4, 0], sizes = [16, 20], strides = [1, 1]} : vector<20x20xbf16> to vector<16x20xbf16>
    %7 = tpu.concatenate %2, %3, %4, %5, %6 in 1 : vector<16x20xbf16>, vector<16x20xbf16>, vector<16x20xbf16>, vector<16x20xbf16>, vector<16x20xbf16> -> vector<16x100xbf16>
    %c0_2 = arith.constant 0 : index
    %c0_3 = arith.constant 0 : index
    %8 = vector.load %arg2[%c0_2, %c0_3] : memref<100x256xbf16, #tpu.memory_space<vmem>>, vector<100x256xbf16>
    %cst = arith.constant dense<0.000000e+00> : vector<16x256xf32>
    %9 = tpu.matmul %7, %8, %cst {dimension_numbers = #tpu.dot_dimension_numbers<[1], [0], [0], [1], [0, 0, 1, 1], [], []>} : vector<16x100xbf16>, vector<100x256xbf16>, vector<16x256xf32> -> vector<16x256xf32>
    %cst_4 = arith.constant 0.000000e+00 : f32
    %10 = vector.broadcast %cst_4 : f32 to vector<16x256xf32>
    %11 = arith.maximumf %9, %10 : vector<16x256xf32>
    %12 = vector.extract_strided_slice %11 {offsets = [0, 0], sizes = [16, 253], strides = [1, 1]} : vector<16x256xf32> to vector<16x253xf32>
    %13 = vector.extract_strided_slice %11 {offsets = [0, 1], sizes = [16, 253], strides = [1, 1]} : vector<16x256xf32> to vector<16x253xf32>
    %14 = arith.maximumf %12, %13 : vector<16x253xf32>
    %15 = vector.extract_strided_slice %11 {offsets = [0, 2], sizes = [16, 253], strides = [1, 1]} : vector<16x256xf32> to vector<16x253xf32>
    %16 = arith.maximumf %14, %15 : vector<16x253xf32>
    %17 = vector.extract_strided_slice %11 {offsets = [0, 3], sizes = [16, 253], strides = [1, 1]} : vector<16x256xf32> to vector<16x253xf32>
    %18 = arith.maximumf %16, %17 : vector<16x253xf32>
    %19 = tpu.iota {dimensions = array<i32: 0>} : vector<253x64xi32>
    %20 = tpu.iota {dimensions = array<i32: 1>} : vector<253x64xi32>
    %c4_i32 = arith.constant 4 : i32
    %21 = vector.broadcast %c4_i32 : i32 to vector<253x64xi32>
    %22 = arith.muli %21, %20 : vector<253x64xi32>
    %23 = arith.cmpi eq, %19, %22 : vector<253x64xi32>
    %cst_5 = arith.constant 1.000000e+00 : f32
    %cst_6 = arith.constant 0.000000e+00 : f32
    %24 = vector.broadcast %cst_5 : f32 to vector<253x64xf32>
    %25 = vector.broadcast %cst_6 : f32 to vector<253x64xf32>
    %26 = arith.select %23, %24, %25 : vector<253x64xi1>, vector<253x64xf32>
    %27 = arith.truncf %26 : vector<253x64xf32> to vector<253x64xbf16>
    %28 = arith.truncf %18 : vector<16x253xf32> to vector<16x253xbf16>
    %cst_7 = arith.constant dense<0.000000e+00> : vector<16x64xf32>
    %29 = tpu.matmul %28, %27, %cst_7 {dimension_numbers = #tpu.dot_dimension_numbers<[1], [0], [0], [1], [0, 0, 1, 1], [], []>} : vector<16x253xbf16>, vector<253x64xbf16>, vector<16x64xf32> -> vector<16x64xf32>
    %30 = vector.extract_strided_slice %29 {offsets = [0, 0], sizes = [13, 64], strides = [1, 1]} : vector<16x64xf32> to vector<13x64xf32>
    %31 = vector.extract_strided_slice %29 {offsets = [1, 0], sizes = [13, 64], strides = [1, 1]} : vector<16x64xf32> to vector<13x64xf32>
    %32 = arith.maximumf %30, %31 : vector<13x64xf32>
    %33 = vector.extract_strided_slice %29 {offsets = [2, 0], sizes = [13, 64], strides = [1, 1]} : vector<16x64xf32> to vector<13x64xf32>
    %34 = arith.maximumf %32, %33 : vector<13x64xf32>
    %35 = vector.extract_strided_slice %29 {offsets = [3, 0], sizes = [13, 64], strides = [1, 1]} : vector<16x64xf32> to vector<13x64xf32>
    %36 = arith.maximumf %34, %35 : vector<13x64xf32>
    %37 = vector.extract_strided_slice %36 {offsets = [0, 0], sizes = [1, 64], strides = [1, 1]} : vector<13x64xf32> to vector<1x64xf32>
    %38 = vector.extract_strided_slice %36 {offsets = [4, 0], sizes = [1, 64], strides = [1, 1]} : vector<13x64xf32> to vector<1x64xf32>
    %39 = vector.extract_strided_slice %36 {offsets = [8, 0], sizes = [1, 64], strides = [1, 1]} : vector<13x64xf32> to vector<1x64xf32>
    %40 = vector.extract_strided_slice %36 {offsets = [12, 0], sizes = [1, 64], strides = [1, 1]} : vector<13x64xf32> to vector<1x64xf32>
    %41 = tpu.concatenate %37, %38, %39, %40 in 0 : vector<1x64xf32>, vector<1x64xf32>, vector<1x64xf32>, vector<1x64xf32> -> vector<4x64xf32>
    %c0_8 = arith.constant 0 : index
    %42 = memref.load %arg3[%c0_8] : memref<1xf32, #tpu.memory_space<smem>>
    %43 = vector.broadcast %42 : f32 to vector<4x64xf32>
    %44 = arith.subf %41, %43 : vector<4x64xf32>
    %cst_9 = arith.constant 0.000000e+00 : f32
    %45 = vector.broadcast %cst_9 : f32 to vector<4x64xf32>
    %46 = arith.cmpf oge, %44, %45 : vector<4x64xf32>
    %cst_10 = arith.constant 1.000000e+00 : f32
    %cst_11 = arith.constant -1.000000e+00 : f32
    %47 = vector.broadcast %cst_10 : f32 to vector<4x64xf32>
    %48 = vector.broadcast %cst_11 : f32 to vector<4x64xf32>
    %49 = arith.select %46, %47, %48 : vector<4x64xi1>, vector<4x64xf32>
    %50 = arith.truncf %49 : vector<4x64xf32> to vector<4x64xbf16>
    %c0_12 = arith.constant 0 : index
    %c0_13 = arith.constant 0 : index
    %c0_14 = arith.constant 0 : index
    %51 = vector.load %arg4[%c0_12, %c0_13, %c0_14] : memref<1x4x64xbf16, #tpu.memory_space<vmem>>, vector<1x4x64xbf16>
    %52 = vector.shape_cast %51 : vector<1x4x64xbf16> to vector<4x64xbf16>
    %53 = vector.shape_cast %50 : vector<4x64xbf16> to vector<1x4x64xbf16>
    tpu.vector_store %arg4[%c0_12, %c0_13, %c0_14], %53 {strides = array<i32>} : memref<1x4x64xbf16, #tpu.memory_space<vmem>>, vector<1x4x64xbf16>,
    return
  }
  func.func @transform_0(%arg0: i32) -> (i32, i32, i32) {
    %c0_i32 = arith.constant 0 : i32
    %c0_i32_0 = arith.constant 0 : i32
    %c0_i32_1 = arith.constant 0 : i32
    return %arg0, %c0_i32, %c0_i32_0 : i32, i32, i32
  }
  func.func @transform_1(%arg0: i32) -> (i32, i32) {
    %c0_i32 = arith.constant 0 : i32
    %c0_i32_0 = arith.constant 0 : i32
    %c0_i32_1 = arith.constant 0 : i32
    return %c0_i32, %c0_i32_0 : i32, i32
  }
  func.func @transform_2(%arg0: i32) -> i32 {
    %c0_i32 = arith.constant 0 : i32
    %c0_i32_0 = arith.constant 0 : i32
    return %c0_i32 : i32
  }
  func.func @transform_3(%arg0: i32) -> (i32, i32, i32) {
    %c0_i32 = arith.constant 0 : i32
    %c0_i32_0 = arith.constant 0 : i32
    %c0_i32_1 = arith.constant 0 : i32
    return %arg0, %c0_i32, %c0_i32_0 : i32, i32, i32
  }
}

</mosaic_0001>

<llo_original>
// kernel: tpu_custom_call.1
$region0: #{tpu_custom_call.1}
  #allocation0 [shape = 'u32[]', space=smem, size = 0x4, offset = 0x4, fixed_abs, tag = 'smem constant byte address 0x4 - core index']
  #allocation1 [shape = 'u32[144,128]{1,0:T(1,128)}', space=vmem, size = 0x12000, scoped, tag = 'internal scratch']
  #allocation2 [shape = 'f32[1]{0:T(128)S(6)}', space=smem, size = 0x200, scoped, tag = 'scoped memory for tpu_custom_call.1']
  %s0 = inlined_call_operand.vmem [shape: bf16[2,20,20], index: 0, kind: input, shape index: {}]
  %s1 = inlined_call_operand.hbm [shape: bf16[100,256], index: 1, kind: input, shape index: {}]
  %s2 = inlined_call_operand.<no memory space> [shape: f32[1], index: 2, kind: input, shape index: {}]
  %s3 = inlined_call_operand.hbm [shape: bf16[2,4,64], index: 3, kind: output, shape index: {}]
  %s4 = sld [smem:[#allocation0]]
  $region49: #{tpu_custom_call.1} parent=0
    _
  %s6 = ssub.s32 1, %s4
  %s7 = scalar_select 0, %s6, %s4
  %8 = sst [smem:[#allocation2]] %s2
  $region1: #{tpu_custom_call.1} parent=0
    #allocation3 [shape = 'u8[53248]{0}', space=vmem, size = 0xd000, scoped, tag = 'input window, operand 1, single buffered']
    #allocation4 [shape = 's32[2]{0}', space=sflag, size = 0x8, scoped, tag = 'scoped memory for tpu_custom_call.1']
    #allocation5 [shape = 's32[2]{0}', space=sflag, size = 0x8, scoped, tag = 'scoped memory for tpu_custom_call.1']
    #allocation6 [shape = 'u8[2048]{0}', space=vmem, size = 0x800, scoped, tag = 'output window, operand 0']
    %9 = vsyncpa [#allocation4], 0
    %10 = vsyncpa [#allocation5], 0
    %s11 = scalar_lea.sflag [#allocation5], 1
    %12 = vsyncpa %s11, 0
    loop: start=0, step=1, limit=4
    $region2: #{tpu_custom_call.1} parent=1 // loop_pre_header
      _
    $region3: #{tpu_custom_call.1} parent=1 // loop_header
      %s14 = sphi 0, %s18
      %p15 = scmp.ge.s32.totalorder %s14, 4
      %s24 = sphi 0, %s26
      %s27 = sphi 0, %s24
      %s28 = sphi 0, %s27
      %s44 = sphi 0, %s28
      %s48 = sphi 0, %s48
      %s50 = sphi 0, %s48
      %s51 = sphi 0, %s50
      %s65 = sphi 0, %s51
      %s69 = sphi 0, %s69
      %s71 = sphi 0, %s69
      %s72 = sphi 0, %s71
      %s86 = sphi 0, %s72
      %s92 = sphi 0, %s94
      %s95 = sphi 0, %s92
      %s96 = sphi 0, %s95
      %s112 = sphi 0, %s96
    $region4: #{tpu_custom_call.1} parent=1 // loop_header_branch
      %17 = sbr.rel (%p15) target = $region8
    $region5: #{tpu_custom_call.1} parent=1 // loop_body
      %s19 = ssub.s32 %s14, 1
      %s20 = ssub.s32 %s14, 2
      %s21 = sadd.s32 %s14, 1
      %s22 = ssub.s32 %s14, %s21
      %p23 = scmp.eq.s32.totalorder %s22, 0
      %s25 = sadd.s32 %s24, 1
      %s26 = scalar_select %p23, %s24, %s25
      %p29 = pneg %p23
      %p30 = scmp.eq.s32.totalorder %s14, 1
      %p31 = por %p29, %p30
      %p32 = scmp.ne.s32.totalorder %s24, %s27
      %p33 = scmp.eq.s32.totalorder %s14, 0
      %p34 = por %p32, %p33
      %p35 = scmp.ne.s32.totalorder %s24, %s27
      %p36 = scmp.eq.s32.totalorder %s19, 1
      %p37 = por %p35, %p36
      %p38 = scmp.ne.s32.totalorder %s27, %s28
      %p39 = scmp.eq.s32.totalorder %s19, 0
      %p40 = por %p38, %p39
      %p41 = scmp.ne.s32.totalorder %s27, %s28
      %p42 = scmp.eq.s32.totalorder %s20, 1
      %p43 = por %p41, %p42
      %p45 = scmp.ne.s32.totalorder %s28, %s44
      %p46 = scmp.eq.s32.totalorder %s20, 0
      %p47 = por %p45, %p46
      %s49 = sadd.s32 %s48, 1
      %p52 = scmp.eq.s32.totalorder %s14, 1
      %p53 = scmp.ne.s32.totalorder %s48, %s50
      %p54 = scmp.eq.s32.totalorder %s14, 0
      %p55 = por %p53, %p54
      %p56 = scmp.ne.s32.totalorder %s48, %s50
      %p57 = scmp.eq.s32.totalorder %s19, 1
      %p58 = por %p56, %p57
      %p59 = scmp.ne.s32.totalorder %s50, %s51
      %p60 = scmp.eq.s32.totalorder %s19, 0
      %p61 = por %p59, %p60
      %p62 = scmp.ne.s32.totalorder %s50, %s51
      %p63 = scmp.eq.s32.totalorder %s20, 1
      %p64 = por %p62, %p63
      %p66 = scmp.ne.s32.totalorder %s51, %s65
      %p67 = scmp.eq.s32.totalorder %s20, 0
      %p68 = por %p66, %p67
      %s70 = sadd.s32 %s69, 1
      %p73 = scmp.eq.s32.totalorder %s14, 1
      %p74 = scmp.ne.s32.totalorder %s69, %s71
      %p75 = scmp.eq.s32.totalorder %s14, 0
      %p76 = por %p74, %p75
      %p77 = scmp.ne.s32.totalorder %s69, %s71
      %p78 = scmp.eq.s32.totalorder %s19, 1
      %p79 = por %p77, %p78
      %p80 = scmp.ne.s32.totalorder %s71, %s72
      %p81 = scmp.eq.s32.totalorder %s19, 0
      %p82 = por %p80, %p81
      %p83 = scmp.ne.s32.totalorder %s71, %s72
      %p84 = scmp.eq.s32.totalorder %s20, 1
      %p85 = por %p83, %p84
      %p87 = scmp.ne.s32.totalorder %s72, %s86
      %p88 = scmp.eq.s32.totalorder %s20, 0
      %p89 = por %p87, %p88
      %s90 = ssub.s32 %s14, %s21
      %p91 = scmp.eq.s32.totalorder %s90, 0
      %s93 = sadd.s32 %s92, 1
      %s94 = scalar_select %p91, %s92, %s93
      %p97 = pneg %p91
      %p98 = scmp.eq.s32.totalorder %s14, 1
      %p99 = por %p97, %p98
      %p100 = scmp.ne.s32.totalorder %s92, %s95
      %p101 = scmp.eq.s32.totalorder %s14, 0
      %p102 = por %p100, %p101
      %p103 = scmp.ne.s32.totalorder %s92, %s95
      %p104 = scmp.eq.s32.totalorder %s19, 1
      %p105 = por %p103, %p104
      %p106 = scmp.ne.s32.totalorder %s95, %s96
      %p107 = scmp.eq.s32.totalorder %s19, 0
      %p108 = por %p106, %p107
      %p109 = scmp.ne.s32.totalorder %s95, %s96
      %p110 = scmp.eq.s32.totalorder %s20, 1
      %p111 = por %p109, %p110
      %p113 = scmp.ne.s32.totalorder %s96, %s112
      %p114 = scmp.eq.s32.totalorder %s20, 0
      %p115 = por %p113, %p114
      %p116 = scmp.le.s32.totalorder 1, %s14
      %p117 = scmp.lt.s32.totalorder %s14, 3
      %p118 = pnand %p116, %p117
      %p119 = pneg %p118
      // Predicated region
      $region9: #{tpu_custom_call.1} parent=5 // pred_check
        _
      $region10: #{tpu_custom_call.1} parent=5 // pred_check_branch
        %121 = sbr.rel (%p118) target = $region12
      $region11: #{tpu_custom_call.1} parent=5 // pred_region
        %s122 = ssub.s32 %s14, 1
        // Predicated region
        $region13: #{tpu_custom_call.1} parent=11 // pred_check
          %p123 = pneg %p61
        $region14: #{tpu_custom_call.1} parent=11 // pred_check_branch
          %125 = sbr.rel (%p123) target = $region16
        $region15: #{tpu_custom_call.1} parent=11 // pred_region
          %s127 = ssub.s32 1664, 1664
          %128 = vsyncadd [#allocation4], %s127
          %s129 = sshll.u32 [#allocation3], 4
          %s130 = int_to_ptr.vmem [resolvable:$true] %s129
          %135 = dma.hbm_to_vmem [thread:$0]  %s1, 1664, %s130, [#allocation4], 128, 128, 8
        $region16: #{tpu_custom_call.1} parent=11 // pred_fallthru
          _
        // Predicated region
        $region17: #{tpu_custom_call.1} parent=11 // pred_check
          %p136 = pneg %p82
        $region18: #{tpu_custom_call.1} parent=11 // pred_check_branch
          %138 = sbr.rel (%p136) target = $region20
        $region19: #{tpu_custom_call.1} parent=11 // pred_region
          _
        $region20: #{tpu_custom_call.1} parent=11 // pred_fallthru
          _
      $region12: #{tpu_custom_call.1} parent=5 // pred_fallthru
        _
      %p139 = scmp.lt.s32.totalorder %s14, 2
      // Predicated region
      $region21: #{tpu_custom_call.1} parent=5 // pred_check
        %p140 = pneg %p139
      $region22: #{tpu_custom_call.1} parent=5 // pred_check_branch
        %142 = sbr.rel (%p140) target = $region24
      $region23: #{tpu_custom_call.1} parent=5 // pred_region
        // Predicated region
        $region25: #{tpu_custom_call.1} parent=23 // pred_check
          %p143 = pneg %p34
        $region26: #{tpu_custom_call.1} parent=23 // pred_check_branch
          %145 = sbr.rel (%p143) target = $region28
        $region27: #{tpu_custom_call.1} parent=23 // pred_region
          %p146 = scmp.lt.s32.totalorder %s14, 1
          %s147 = scalar_select %p146, %s14, 1
          %s148 = smul.addr %s147, 3
          %s149 = smul.addr %s148, 4
          %s150 = scalar_lea.vmem %s0, %s149
        $region28: #{tpu_custom_call.1} parent=23 // pred_fallthru
          _
      $region24: #{tpu_custom_call.1} parent=5 // pred_fallthru
        _
      %p151 = scmp.le.s32.totalorder 1, %s14
      %p152 = scmp.lt.s32.totalorder %s14, 3
      %p153 = pnand %p151, %p152
      %p154 = pneg %p153
      // Predicated region
      $region29: #{tpu_custom_call.1} parent=5 // pred_check
        _
      $region30: #{tpu_custom_call.1} parent=5 // pred_check_branch
        %156 = sbr.rel (%p153) target = $region32
      $region31: #{tpu_custom_call.1} parent=5 // pred_region
        %s157 = ssub.s32 %s14, 1
        // Predicated region
        $region33: #{tpu_custom_call.1} parent=31 // pred_check
          %p158 = pneg %p61
        $region34: #{tpu_custom_call.1} parent=31 // pred_check_branch
          %160 = sbr.rel (%p158) target = $region36
        $region35: #{tpu_custom_call.1} parent=31 // pred_region
          %161 = dma.done [#allocation4], 1664
        $region36: #{tpu_custom_call.1} parent=31 // pred_fallthru
          _
        %p162 = scmp.lt.s32.totalorder %s19, 1
        %s163 = scalar_select %p162, %s19, 1
        %s164 = smul.addr %s163, 3
        %s165 = smul.addr %s164, 4
        %s166 = scalar_lea.vmem %s0, %s165
        %p167 = pneg %p40
        %p168 = pneg %p37
        %p169 = pneg %p61
        %p170 = pneg %p58
        %p171 = pneg %p82
        %p172 = pneg %p79
        %p173 = pneg %p108
        %p174 = pneg %p105
        %s175 = sand.u32 %s95, 1
        %s176 = scalar_lea.sflag [#allocation5], %s175
        %s177 = sand.u32 %s95, 1
        %s178 = smul.addr %s177, 2
        %s179 = scalar_lea.vmem [#allocation6], %s178
        %p180 = scmp.lt.s32.totalorder %s19, 1
        %s181 = scalar_select %p180, %s19, 1
        %s182 = smul.addr %s181, 3
        %s183 = smul.addr %s182, 4
        %s184 = scalar_lea.vmem %s0, %s183
        %v186 = vld [vmem:[%s184] sm:$0xf]
        %v187 = vld [vmem:[%s184 + $0x4] sm:$0xf]
        %v188 = vld [vmem:[%s184 + $0x8] sm:$0x3]
        %v191 = vunpack.c.l.b16 %v186
        %v192 = vunpack.c.l.b16 %v187
        %v193 = vpack.c.b16 %v192, %v191
        %v195 = vunpack.c.l.b16 %v188
        %v196 = vpack.c.b16 %v195, %v195
        %vm197 = vsmask.f32 7424
        %v199 = vshrl.u32 %v193, 16
        %v201 = vshll.u32 %v193, 16
        %v203 = vrot.slane %v201, 1
        %v204 = vor.u32 %v199, %v203
        %v206 = vshll.u32 %v196, 16
        %v208 = vrot.slane %v206, 1
        %v209 = vsel %vm197, %v204, %v208
        %210 = vrot.lane.b32.xlu0 %v209, 20
        %v211 = vpop.permute.xlu0 %210
        %vm212 = vcmask 1046528
        %v213 = vrot.slane %v193, 1
        %v214 = vrot.slane %v196, 1
        %v215 = vsel %vm212, %v213, %v214
        %216 = vrot.lane.b32.xlu0 %v215, 40
        %v217 = vpop.permute.xlu0 %216
        %vm218 = vsmask.f32 6400
        %v219 = vrot.slane %v199, 1
        %v220 = vrot.slane %v201, 2
        %v221 = vor.u32 %v219, %v220
        %v222 = vshrl.u32 %v196, 16
        %v224 = vrot.slane %v222, 1
        %v225 = vrot.slane %v206, 2
        %v226 = vor.u32 %v224, %v225
        %v227 = vsel %vm218, %v221, %v226
        %228 = vrot.lane.b32.xlu0 %v227, 60
        %v229 = vpop.permute.xlu0 %228
        %vm230 = vcmask 1045504
        %v231 = vrot.slane %v193, 2
        %v232 = vrot.slane %v196, 2
        %v233 = vsel %vm230, %v231, %v232
        %234 = vrot.lane.b32.xlu0 %v233, 80
        %v235 = vpop.permute.xlu0 %234
        %vm236 = vcmask 162816
        %v238 = vsel %vm236, %v193, %v211
        %vm239 = vcmask 326656
        %v241 = vsel %vm239, %v238, %v217
        %vm242 = vcmask 490496
        %v244 = vsel %vm242, %v241, %v229
        %vm245 = vcmask 654336
        %v247 = vsel %vm245, %v244, %v235
        %v248 = vld [vmem:[#allocation3] sm:$0xff]
        %v249 = vld [vmem:[#allocation3 + $0x8] sm:$0xff]
        %v250 = vld [vmem:[#allocation3 + $0x10] sm:$0xff]
        %v251 = vld [vmem:[#allocation3 + $0x18] sm:$0xff]
        %v252 = vld [vmem:[#allocation3 + $0x20] sm:$0xff]
        %v253 = vld [vmem:[#allocation3 + $0x28] sm:$0xff]
        %v254 = vld [vmem:[#allocation3 + $0x30] sm:$0xff]
        %v255 = vld [vmem:[#allocation3 + $0x38] sm:$0xff]
        %v256 = vld [vmem:[#allocation3 + $0x40] sm:$0xff]
        %v257 = vld [vmem:[#allocation3 + $0x48] sm:$0xff]
        %v258 = vld [vmem:[#allocation3 + $0x50] sm:$0xff]
        %v259 = vld [vmem:[#allocation3 + $0x58] sm:$0xff]
        %v260 = vld [vmem:[#allocation3 + $0x60] sm:$0x33]
        %v274 = vunpack.c.l.b16 %v248
        %v275 = vunpack.c.h.b16 %v248
        %v276 = vunpack.c.l.b16 %v249
        %v277 = vunpack.c.h.b16 %v249
        %v278 = vunpack.c.l.b16 %v250
        %v279 = vunpack.c.h.b16 %v250
        %v280 = vunpack.c.l.b16 %v251
        %v281 = vunpack.c.h.b16 %v251
        %v282 = vunpack.c.l.b16 %v252
        %v283 = vunpack.c.h.b16 %v252
        %v284 = vunpack.c.l.b16 %v253
        %v285 = vunpack.c.h.b16 %v253
        %v286 = vunpack.c.l.b16 %v254
        %v287 = vunpack.c.h.b16 %v254
        %v288 = vunpack.c.l.b16 %v255
        %v289 = vunpack.c.h.b16 %v255
        %v290 = vunpack.c.l.b16 %v256
        %v291 = vunpack.c.h.b16 %v256
        %v292 = vunpack.c.l.b16 %v257
        %v293 = vunpack.c.h.b16 %v257
        %v294 = vunpack.c.l.b16 %v258
        %v295 = vunpack.c.h.b16 %v258
        %v296 = vunpack.c.l.b16 %v259
        %v297 = vunpack.c.h.b16 %v259
        %v298 = vunpack.c.l.b16 %v260
        %v299 = vunpack.c.h.b16 %v260
        %v300 = vpack.c.b16 %v276, %v274
        %v301 = vpack.c.b16 %v277, %v275
        %v302 = vpack.c.b16 %v280, %v278
        %v303 = vpack.c.b16 %v281, %v279
        %v304 = vpack.c.b16 %v284, %v282
        %v305 = vpack.c.b16 %v285, %v283
        %v306 = vpack.c.b16 %v288, %v286
        %v307 = vpack.c.b16 %v289, %v287
        %v308 = vpack.c.b16 %v292, %v290
        %v309 = vpack.c.b16 %v293, %v291
        %v310 = vpack.c.b16 %v296, %v294
        %v311 = vpack.c.b16 %v297, %v295
        %v312 = vpack.c.b16 %v298, %v298
        %v313 = vpack.c.b16 %v299, %v299
        %vm326 = vcmask 818176
        %v327 = vsel %vm326, %v247, 0
        %vm329 = vcmask 1041408
        %v331 = vsel %vm329, %v312, 0
        %v334 = vsel %vm329, %v313, 0
        %336 = vmatprep.subr.bf16.mxu0 %v301
        %337 = vmatpush1.bf16.msra.mxu0 %v300
        %338 = vmatprep.subr.bf16.mxu0 %v303
        %339 = vmatpush1.bf16.msra.mxu0 %v302
        %340 = vmatprep.subr.bf16.mxu0 %v305
        %341 = vmatpush1.bf16.msra.mxu0 %v304
        %342 = vmatprep.subr.bf16.mxu0 %v307
        %343 = vmatpush1.bf16.msra.mxu0 %v306
        %344 = vmatprep.subr.bf16.mxu0 %v309
        %345 = vmatpush1.bf16.msra.mxu0 %v308
        %346 = vmatprep.subr.bf16.mxu0 %v311
        %347 = vmatpush1.bf16.msra.mxu0 %v310
        %348 = vmatprep.subr.bf16.mxu0 %v334
        %349 = vmatpush1.bf16.msra.mxu0 %v331
        %350 = vmatprep.subr.bf16.mxu0 0
        %351 = vmatpush1.bf16.msra.mxu0 0
        %352 = vmatprep.subr.bf16.mxu0 0
        %353 = vmatpush1.bf16.msra.mxu0 0
        %354 = vmatprep.subr.bf16.mxu0 0
        %355 = vmatpush1.bf16.msra.mxu0 0
        %356 = vmatprep.subr.bf16.mxu0 0
        %357 = vmatpush1.bf16.msra.mxu0 0
        %358 = vmatprep.subr.bf16.mxu0 0
        %359 = vmatpush1.bf16.msra.mxu0 0
        %360 = vmatprep.subr.bf16.mxu0 0
        %361 = vmatpush1.bf16.msra.mxu0 0
        %362 = vmatprep.subr.bf16.mxu0 0
        %363 = vmatpush1.bf16.msra.mxu0 0
        %364 = vmatprep.subr.bf16.mxu0 0
        %365 = vmatpush1.bf16.msra.mxu0 0
        %366 = vmatprep.subr.bf16.mxu0 0
        %367 = vmatpush1.bf16.msra.mxu0 0
        %368 = vmatprep.mubr.bf16.mxu0 0
        %369 = vmatmul.mubr.bf16.gmra.mrb[0].mxu0 %v327
        %v370 = vpop.f32.mrb[0].mxu0
        %v371 = vadd.f32 0.0, %v370
        %v372 = vpop.f32.mrb[0].mxu0
        %v373 = vadd.f32 0.0, %v372
        %v374 = vpop.f32.mrb[0].mxu0
        %v375 = vadd.f32 0.0, %v374
        %v376 = vpop.f32.mrb[0].mxu0
        %v377 = vadd.f32 0.0, %v376
        %378 = vdwg.mxu0
        %v379 = vmax.f32 %v371, 0.0
        %v380 = vmax.f32 %v373, 0.0
        %v381 = vmax.f32 %v375, 0.0
        %v382 = vmax.f32 %v377, 0.0
        %387 = vrot.lane.b32.xlu0 %v379, 127
        %v388 = vpop.permute.xlu0 %387
        %389 = vrot.lane.b32.xlu0 %v380, 127
        %v390 = vpop.permute.xlu0 %389
        %391 = vrot.lane.b32.xlu0 %v381, 127
        %v392 = vpop.permute.xlu0 %391
        %393 = vrot.lane.b32.xlu0 %v382, 127
        %v394 = vpop.permute.xlu0 %393
        %vm395 = vcmask 1039360
        %v396 = vsel %vm395, %v388, %v390
        %v397 = vsel %vm395, %v392, %v394
        %v402 = vmax.f32 %v379, %v396
        %v403 = vmax.f32 %v380, %v390
        %v404 = vmax.f32 %v381, %v397
        %v405 = vmax.f32 %v382, %v394
        %406 = vrot.lane.b32.xlu0 %v379, 126
        %v407 = vpop.permute.xlu0 %406
        %408 = vrot.lane.b32.xlu0 %v380, 126
        %v409 = vpop.permute.xlu0 %408
        %410 = vrot.lane.b32.xlu0 %v381, 126
        %v411 = vpop.permute.xlu0 %410
        %412 = vrot.lane.b32.xlu0 %v382, 126
        %v413 = vpop.permute.xlu0 %412
        %vm414 = vcmask 1031168
        %v415 = vsel %vm414, %v407, %v409
        %v416 = vsel %vm414, %v411, %v413
        %v421 = vmax.f32 %v402, %v415
        %v422 = vmax.f32 %v403, %v409
        %v423 = vmax.f32 %v404, %v416
        %v424 = vmax.f32 %v405, %v413
        %425 = vrot.lane.b32.xlu0 %v379, 125
        %v426 = vpop.permute.xlu0 %425
        %427 = vrot.lane.b32.xlu0 %v380, 125
        %v428 = vpop.permute.xlu0 %427
        %429 = vrot.lane.b32.xlu0 %v381, 125
        %v430 = vpop.permute.xlu0 %429
        %431 = vrot.lane.b32.xlu0 %v382, 125
        %v432 = vpop.permute.xlu0 %431
        %vm433 = vcmask 1022976
        %v434 = vsel %vm433, %v426, %v428
        %v435 = vsel %vm433, %v430, %v432
        %v440 = vmax.f32 %v421, %v434
        %v441 = vmax.f32 %v422, %v428
        %v442 = vmax.f32 %v423, %v435
        %v443 = vmax.f32 %v424, %v432
        %v444 = vlaneseq
        %v445 = vshrl.u32 %v444, 7
        %v446 = vadd.s32 %v445, 8
        %v447 = vadd.s32 %v445, 16
        %v448 = vadd.s32 %v445, 24
        %v449 = vadd.s32 %v445, 32
        %v450 = vadd.s32 %v445, 40
        %v451 = vadd.s32 %v445, 48
        %v452 = vadd.s32 %v445, 56
        %v453 = vadd.s32 %v445, 64
        %v454 = vadd.s32 %v445, 72
        %v455 = vadd.s32 %v445, 80
        %v456 = vadd.s32 %v445, 88
        %v457 = vadd.s32 %v445, 96
        %v458 = vadd.s32 %v445, 104
        %v459 = vadd.s32 %v445, 112
        %v460 = vadd.s32 %v445, 120
        %v461 = vadd.s32 %v445, 128
        %v462 = vadd.s32 %v445, 136
        %v463 = vadd.s32 %v445, 144
        %v464 = vadd.s32 %v445, 152
        %v465 = vadd.s32 %v445, 160
        %v466 = vadd.s32 %v445, 168
        %v467 = vadd.s32 %v445, 176
        %v468 = vadd.s32 %v445, 184
        %v469 = vadd.s32 %v445, 192
        %v470 = vadd.s32 %v445, 200
        %v471 = vadd.s32 %v445, 208
        %v472 = vadd.s32 %v445, 216
        %v473 = vadd.s32 %v445, 224
        %v474 = vadd.s32 %v445, 232
        %v475 = vadd.s32 %v445, 240
        %v476 = vadd.s32 %v445, 248
        %v477 = vlaneseq
        %v478 = vand.u32 %v477, 127
        %v479 = vmul.u32 %v478, 4
        %vm480 = vcmp.eq.s32.totalorder %v445, %v479
        %vm481 = vcmp.eq.s32.totalorder %v446, %v479
        %vm482 = vcmp.eq.s32.totalorder %v447, %v479
        %vm483 = vcmp.eq.s32.totalorder %v448, %v479
        %vm484 = vcmp.eq.s32.totalorder %v449, %v479
        %vm485 = vcmp.eq.s32.totalorder %v450, %v479
        %vm486 = vcmp.eq.s32.totalorder %v451, %v479
        %vm487 = vcmp.eq.s32.totalorder %v452, %v479
        %vm488 = vcmp.eq.s32.totalorder %v453, %v479
        %vm489 = vcmp.eq.s32.totalorder %v454, %v479
        %vm490 = vcmp.eq.s32.totalorder %v455, %v479
        %vm491 = vcmp.eq.s32.totalorder %v456, %v479
        %vm492 = vcmp.eq.s32.totalorder %v457, %v479
        %vm493 = vcmp.eq.s32.totalorder %v458, %v479
        %vm494 = vcmp.eq.s32.totalorder %v459, %v479
        %vm495 = vcmp.eq.s32.totalorder %v460, %v479
        %vm496 = vcmp.eq.s32.totalorder %v461, %v479
        %vm497 = vcmp.eq.s32.totalorder %v462, %v479
        %vm498 = vcmp.eq.s32.totalorder %v463, %v479
        %vm499 = vcmp.eq.s32.totalorder %v464, %v479
        %vm500 = vcmp.eq.s32.totalorder %v465, %v479
        %vm501 = vcmp.eq.s32.totalorder %v466, %v479
        %vm502 = vcmp.eq.s32.totalorder %v467, %v479
        %vm503 = vcmp.eq.s32.totalorder %v468, %v479
        %vm504 = vcmp.eq.s32.totalorder %v469, %v479
        %vm505 = vcmp.eq.s32.totalorder %v470, %v479
        %vm506 = vcmp.eq.s32.totalorder %v471, %v479
        %vm507 = vcmp.eq.s32.totalorder %v472, %v479
        %vm508 = vcmp.eq.s32.totalorder %v473, %v479
        %vm509 = vcmp.eq.s32.totalorder %v474, %v479
        %vm510 = vcmp.eq.s32.totalorder %v475, %v479
        %vm511 = vcmp.eq.s32.totalorder %v476, %v479
        %v512 = vsel %vm480, 1.0, 0.0
        %v513 = vsel %vm481, 1.0, 0.0
        %v514 = vsel %vm482, 1.0, 0.0
        %v515 = vsel %vm483, 1.0, 0.0
        %v516 = vsel %vm484, 1.0, 0.0
        %v517 = vsel %vm485, 1.0, 0.0
        %v518 = vsel %vm486, 1.0, 0.0
        %v519 = vsel %vm487, 1.0, 0.0
        %v520 = vsel %vm488, 1.0, 0.0
        %v521 = vsel %vm489, 1.0, 0.0
        %v522 = vsel %vm490, 1.0, 0.0
        %v523 = vsel %vm491, 1.0, 0.0
        %v524 = vsel %vm492, 1.0, 0.0
        %v525 = vsel %vm493, 1.0, 0.0
        %v526 = vsel %vm494, 1.0, 0.0
        %v527 = vsel %vm495, 1.0, 0.0
        %v528 = vsel %vm496, 1.0, 0.0
        %v529 = vsel %vm497, 1.0, 0.0
        %v530 = vsel %vm498, 1.0, 0.0
        %v531 = vsel %vm499, 1.0, 0.0
        %v532 = vsel %vm500, 1.0, 0.0
        %v533 = vsel %vm501, 1.0, 0.0
        %v534 = vsel %vm502, 1.0, 0.0
        %v535 = vsel %vm503, 1.0, 0.0
        %v536 = vsel %vm504, 1.0, 0.0
        %v537 = vsel %vm505, 1.0, 0.0
        %v538 = vsel %vm506, 1.0, 0.0
        %v539 = vsel %vm507, 1.0, 0.0
        %v540 = vsel %vm508, 1.0, 0.0
        %v541 = vsel %vm509, 1.0, 0.0
        %v542 = vsel %vm510, 1.0, 0.0
        %v543 = vsel %vm511, 1.0, 0.0
        %v544 = vpack.c.bf16 %v513, %v512
        %v545 = vpack.c.bf16 %v515, %v514
        %v546 = vpack.c.bf16 %v517, %v516
        %v547 = vpack.c.bf16 %v519, %v518
        %v548 = vpack.c.bf16 %v521, %v520
        %v549 = vpack.c.bf16 %v523, %v522
        %v550 = vpack.c.bf16 %v525, %v524
        %v551 = vpack.c.bf16 %v527, %v526
        %v552 = vpack.c.bf16 %v529, %v528
        %v553 = vpack.c.bf16 %v531, %v530
        %v554 = vpack.c.bf16 %v533, %v532
        %v555 = vpack.c.bf16 %v535, %v534
        %v556 = vpack.c.bf16 %v537, %v536
        %v557 = vpack.c.bf16 %v539, %v538
        %v558 = vpack.c.bf16 %v541, %v540
        %v559 = vpack.c.bf16 %v543, %v542
        %v560 = vpack.c.bf16 %v442, %v440
        %v561 = vpack.c.bf16 %v443, %v441
        %v563 = vsel %vm433, %v561, 0
        %vm565 = vcmask 1045504
        %vm566 = vcmask 1046528
        %v567 = vsel %vm565, 4294967295, 65535
        %v568 = vsel %vm566, %v567, 0
        %v570 = vand.u32 %v559, %v568
        %572 = vmatprep.subr.bf16.mxu0 0
        %573 = vmatpush1.bf16.msra.mxu0 %v544
        %574 = vmatprep.subr.bf16.mxu0 0
        %575 = vmatpush1.bf16.msra.mxu0 %v545
        %576 = vmatprep.subr.bf16.mxu0 0
        %577 = vmatpush1.bf16.msra.mxu0 %v546
        %578 = vmatprep.subr.bf16.mxu0 0
        %579 = vmatpush1.bf16.msra.mxu0 %v547
        %580 = vmatprep.subr.bf16.mxu0 0
        %581 = vmatpush1.bf16.msra.mxu0 %v548
        %582 = vmatprep.subr.bf16.mxu0 0
        %583 = vmatpush1.bf16.msra.mxu0 %v549
        %584 = vmatprep.subr.bf16.mxu0 0
        %585 = vmatpush1.bf16.msra.mxu0 %v550
        %586 = vmatprep.subr.bf16.mxu0 0
        %587 = vmatpush1.bf16.msra.mxu0 %v551
        %588 = vmatprep.subr.bf16.mxu0 0
        %589 = vmatpush1.bf16.msra.mxu0 %v552
        %590 = vmatprep.subr.bf16.mxu0 0
        %591 = vmatpush1.bf16.msra.mxu0 %v553
        %592 = vmatprep.subr.bf16.mxu0 0
        %593 = vmatpush1.bf16.msra.mxu0 %v554
        %594 = vmatprep.subr.bf16.mxu0 0
        %595 = vmatpush1.bf16.msra.mxu0 %v555
        %596 = vmatprep.subr.bf16.mxu0 0
        %597 = vmatpush1.bf16.msra.mxu0 %v556
        %598 = vmatprep.subr.bf16.mxu0 0
        %599 = vmatpush1.bf16.msra.mxu0 %v557
        %600 = vmatprep.subr.bf16.mxu0 0
        %601 = vmatpush1.bf16.msra.mxu0 %v558
        %602 = vmatprep.subr.bf16.mxu0 0
        %603 = vmatpush1.bf16.msra.mxu0 %v570
        %604 = vmatprep.mubr.bf16.mxu0 %v563
        %605 = vmatmul.mubr.bf16.gmra.mrb[0].mxu0 %v560
        %v606 = vpop.f32.mrb[0].mxu0
        %v607 = vadd.f32 0.0, %v606
        %v608 = vpop.f32.mrb[0].mxu0
        %v609 = vpop.f32.mrb[0].mxu0
        %v610 = vadd.f32 0.0, %v609
        %v611 = vpop.f32.mrb[0].mxu0
        %612 = vdwg.mxu0
        %v615 = vrot.slane %v607, 1
        %v616 = vrot.slane %v610, 1
        %v617 = vsel %vm566, %v615, %v616
        %v620 = vmax.f32 %v607, %v617
        %v621 = vmax.f32 %v610, %v616
        %v622 = vrot.slane %v607, 2
        %v623 = vrot.slane %v610, 2
        %v624 = vsel %vm565, %v622, %v623
        %v627 = vmax.f32 %v620, %v624
        %v628 = vmax.f32 %v621, %v623
        %vm629 = vcmask 1044480
        %v630 = vrot.slane %v607, 3
        %v631 = vrot.slane %v610, 3
        %v632 = vsel %vm629, %v630, %v631
        %v635 = vmax.f32 %v627, %v632
        %v636 = vmax.f32 %v628, %v631
        %v638 = vrot.slane %v635, 3
        %v641 = vrot.slane %v636, 6
        %v643 = vrot.slane %v636, 1
        %vm645 = vcmask 1040384
        %v646 = vsel %vm645, %v635, %v638
        %v647 = vsel %vm329, %v646, %v641
        %vm648 = vcmask 1042432
        %v649 = vsel %vm648, %v647, %v643
        %s650 = sld [smem:[#allocation2]]
        %v651 = vstv %s650
        %v652 = vsub.f32 %v649, %v651
        %vm653 = vcmp.ge.f32.partialorder %v652, 0.0
        %v654 = vsel %vm653, 1.0, -1.0
        %v655 = vpack.c.bf16 %v654, %v654
        %vm656 = vcmask 517120
        %657 = vst.msk [vmem:[%s179] sm:$0x3] %vm656, %v655
        %s658 = sand.u32 %s95, 1
        %s659 = scalar_lea.sflag [#allocation5], %s658
        %s660 = sand.u32 %s95, 1
        %s661 = smul.addr %s660, 2
        %s662 = scalar_lea.vmem [#allocation6], %s661
        // Predicated region
        $region37: #{tpu_custom_call.1} parent=31 // pred_check
          %p663 = pneg %p105
        $region38: #{tpu_custom_call.1} parent=31 // pred_check_branch
          %665 = sbr.rel (%p663) target = $region40
        $region39: #{tpu_custom_call.1} parent=31 // pred_region
          %s667 = ssub.s32 32, 32
          %668 = vsyncadd %s659, %s667
          %s669 = smul.addr %s19, 32
          %s670 = scalar_lea.hbm %s3, %s669
          %s672 = sshll.u32 %s662, 4
          %s673 = int_to_ptr.vmem [resolvable:$true] %s672
          %675 = dma.vmem_to_hbm [thread:$0]  %s673, 32, %s670, %s659
        $region40: #{tpu_custom_call.1} parent=31 // pred_fallthru
          _
      $region32: #{tpu_custom_call.1} parent=5 // pred_fallthru
        _
      %p676 = scmp.le.s32.totalorder 2, %s14
      // Predicated region
      $region41: #{tpu_custom_call.1} parent=5 // pred_check
        %p677 = pneg %p676
      $region42: #{tpu_custom_call.1} parent=5 // pred_check_branch
        %679 = sbr.rel (%p677) target = $region44
      $region43: #{tpu_custom_call.1} parent=5 // pred_region
        %s680 = ssub.s32 %s14, 2
        // Predicated region
        $region45: #{tpu_custom_call.1} parent=43 // pred_check
          %p681 = pneg %p111
        $region46: #{tpu_custom_call.1} parent=43 // pred_check_branch
          %683 = sbr.rel (%p681) target = $region48
        $region47: #{tpu_custom_call.1} parent=43 // pred_region
          %s684 = sand.u32 %s96, 1
          %s685 = scalar_lea.sflag [#allocation5], %s684
          %s686 = sand.u32 %s96, 1
          %s687 = smul.addr %s686, 2
          %s688 = scalar_lea.vmem [#allocation6], %s687
          %689 = dma.done %s685, 32
        $region48: #{tpu_custom_call.1} parent=43 // pred_fallthru
          _
      $region44: #{tpu_custom_call.1} parent=5 // pred_fallthru
        _
    $region6: #{tpu_custom_call.1} parent=1 // loop_footer
      %s18 = sadd.s32 1, %s14
    $region7: #{tpu_custom_call.1} parent=1 // loop_footer_branch
      %13 = sbr.rel target = $region3
    $region8: #{tpu_custom_call.1} parent=1 // loop_exit
      _
    %690 = vsyncpa [#allocation4], 1
    %s691 = scalar_lea.sflag [#allocation4], 1
    %692 = vsyncpa %s691, 1
    %693 = vsyncpa [#allocation5], 1
    %s694 = scalar_lea.sflag [#allocation5], 1
    %695 = vsyncpa %s694, 1

</llo_original>
